<compile_context>
chip_gen: v7x
topology: tpu7x:2x2x1
jax: 0.10.0
libtpu: 0.0.40
codegen_flags: <defaults>
</compile_context>

<pallas_src>
import functools

import jax
import jax.numpy as jnp
from jax.experimental import pallas as pl
from jax.experimental.pallas import tpu as pltpu

BN_EPS = 1e-5


def _round_up(x, m):
    return ((x + m - 1) // m) * m


def _kernel_body(x_ref, w_ref, g_ref, beta_ref, o_ref, acc_ref):
    """One (M, tn) output-column tile; accumulates the matmul across K tiles.

    On the last K step the per-column BatchNorm statistics are folded into a
    single scale/shift pass over the slab, followed by ReLU.
    """
    k = pl.program_id(1)

    @pl.when(k == 0)
    def _():
        acc_ref[...] = jnp.zeros_like(acc_ref)

    acc_ref[...] += jnp.dot(
        x_ref[...], w_ref[...], preferred_element_type=jnp.float32
    )

    @pl.when(k == pl.num_programs(1) - 1)
    def _():
        y = acc_ref[...]                                             # (M, tn) f32
        mean = jnp.mean(y, axis=0, keepdims=True)                    # (1, tn)
        var = jnp.mean(jnp.square(y - mean), axis=0, keepdims=True)  # biased var
        scale = g_ref[...] * jax.lax.rsqrt(var + BN_EPS)             # (1, tn)
        shift = beta_ref[...] - mean * scale                         # (1, tn)
        # Single scale/shift slab pass + ReLU.
        o_ref[...] = jnp.maximum(y * scale + shift, 0.0).astype(o_ref.dtype)


def _kernel_inplace(x_ref, w_ref, g_ref, beta_ref, o_ref):
    # f32 output: accumulate straight into the (K-resident) output block.
    _kernel_body(x_ref, w_ref, g_ref, beta_ref, o_ref, o_ref)


def _kernel_scratch(x_ref, w_ref, g_ref, beta_ref, o_ref, acc_ref):
    # Low-precision output: keep a separate f32 accumulator.
    _kernel_body(x_ref, w_ref, g_ref, beta_ref, o_ref, acc_ref)


@functools.partial(jax.jit, static_argnames=("tk", "tn", "compute_dtype"))
def dense_block_forward(x, weight, bias, gamma, beta, *, tk=None, tn=None,
                        compute_dtype=None):
    """x: (B, S, in) or (B, in).  weight: (out, in) as in nn.Linear.

    `bias` is accepted for API parity but is not used by the kernel: a
    per-column constant cancels exactly under the BatchNorm mean subtraction.
    `compute_dtype` (e.g. jnp.bfloat16) optionally casts x / W for the matmul
    while keeping an f32 accumulator.
    """
    del bias  # cancels under BatchNorm; removing it saves one input stream.

    orig_shape = x.shape
    out_f, in_f = weight.shape
    x2d = x.reshape(-1, in_f)                                # (M, K)
    M, K = x2d.shape

    mm_bytes = jnp.dtype(x.dtype if compute_dtype is None else compute_dtype).itemsize
    # Lane-aligned tiles; tk sized so the K axis actually pipelines.
    if tk is None:
        tk = min(1024 if mm_bytes <= 2 else 512, _round_up(K, 128))
    if tn is None:
        tn = min(256, _round_up(out_f, 128))
    assert tk % 128 == 0 and tn % 128 == 0, (tk, tn)

    Kp = _round_up(K, tk)
    Np = _round_up(out_f, tn)

    w_t = weight.T                                           # (K, N)
    if compute_dtype is not None:
        x2d = x2d.astype(compute_dtype)
        w_t = w_t.astype(compute_dtype)

    # Zero-pad K / N to tile multiples (padded x/W rows contribute 0; padded
    # output columns are sliced off below and produce no NaNs).
    if Kp != K:
        x2d = jnp.pad(x2d, ((0, 0), (0, Kp - K)))
        w_t = jnp.pad(w_t, ((0, Kp - K), (0, 0)))
    if Np != out_f:
        w_t = jnp.pad(w_t, ((0, 0), (0, Np - out_f)))
        gamma = jnp.pad(gamma, (0, Np - out_f))
        beta = jnp.pad(beta, (0, Np - out_f))

    g2d = gamma.reshape(1, Np).astype(jnp.float32)
    beta2d = beta.reshape(1, Np).astype(jnp.float32)

    out_dtype = x.dtype
    use_scratch = out_dtype != jnp.float32
    kernel = _kernel_scratch if use_scratch else _kernel_inplace
    scratch = [pltpu.VMEM((M, tn), jnp.float32)] if use_scratch else []

    # Explicit VMEM budget (double-buffered tiles + optional accumulator),
    # clamped so the configuration stays viable on 64 MiB (v7x) parts.
    x_b = jnp.dtype(x2d.dtype).itemsize
    est = (2 * M * tk * x_b                                  # x tiles
           + 2 * tk * tn * x_b                               # W^T tiles
           + 2 * M * tn * jnp.dtype(out_dtype).itemsize      # output tiles
           + (M * tn * 4 if use_scratch else 0)              # f32 accumulator
           + 8 * tn * 4)                                     # gamma/beta tiles
    vmem_limit = int(min(max(int(est * 1.3), 32 * 1024 * 1024),
                         100 * 1024 * 1024))
    # TODO(synk): for very large M where an (M, tn) slab no longer fits VMEM,
    # switch to a two-pass scheme (matmul + per-column sum/sumsq, then a
    # streaming normalize+ReLU pass over M tiles).

    out2d = pl.pallas_call(
        kernel,
        out_shape=jax.ShapeDtypeStruct((M, Np), out_dtype),
        grid_spec=pltpu.PrefetchScalarGridSpec(
            num_scalar_prefetch=0,
            grid=(Np // tn, Kp // tk),                       # (N parallel, K reduce last)
            in_specs=[
                pl.BlockSpec((M, tk), lambda j, k: (0, k)),    # x tile
                pl.BlockSpec((tk, tn), lambda j, k: (k, j)),   # W^T tile
                pl.BlockSpec((1, tn), lambda j, k: (0, j)),    # BN gamma
                pl.BlockSpec((1, tn), lambda j, k: (0, j)),    # BN beta
            ],
            out_specs=pl.BlockSpec((M, tn), lambda j, k: (0, j)),
            scratch_shapes=scratch,
        ),
        compiler_params=pltpu.CompilerParams(
            dimension_semantics=("parallel", "arbitrary"),
            vmem_limit_bytes=vmem_limit,
        ),
    )(x2d, w_t, g2d, beta2d)

    if Np != out_f:
        out2d = out2d[:, :out_f]
    return out2d.reshape(*orig_shape[:-1], out_f)


def _reference(x, weight, bias, gamma, beta):
    """Pure-JAX reference reproducing the PyTorch forward (training-mode BN)."""
    y = x @ weight.T + bias
    y2d = y.reshape(-1, y.shape[-1])
    mean = jnp.mean(y2d, axis=0)
    var = jnp.mean(jnp.square(y2d - mean), axis=0)
    y_hat = (y - mean) / jnp.sqrt(var + BN_EPS) * gamma + beta
    return jnp.maximum(y_hat, 0.0)


if __name__ == "__main__":
    # Small, module-consistent shapes: x is (batch, seq, in_features).
    B, S, IN_F, OUT_F = 2, 8, 32, 32

    key = jax.random.PRNGKey(0)
    kx, kw, kb = jax.random.split(key, 3)

    x = jax.random.normal(kx, (B, S, IN_F), dtype=jnp.float32)

    # Deterministic parameter init (mimics nn.Linear default uniform init).
    bound = 1.0 / jnp.sqrt(jnp.float32(IN_F))
    weight = jax.random.uniform(kw, (OUT_F, IN_F), jnp.float32, -bound, bound)
    bias = jax.random.uniform(kb, (OUT_F,), jnp.float32, -bound, bound)
    gamma = jnp.ones((OUT_F,), jnp.float32)   # BatchNorm1d weight
    beta = jnp.zeros((OUT_F,), jnp.float32)   # BatchNorm1d bias

    out = dense_block_forward(x, weight, bias, gamma, beta)
    out = jax.block_until_ready(out)

    ref = _reference(x, weight, bias, gamma, beta)
    assert out.shape == (B, S, OUT_F), out.shape
    assert jnp.allclose(out, ref, atol=1e-5, rtol=1e-5), (
        float(jnp.max(jnp.abs(out - ref)))
    )

    print("KERNEL_OK")
</pallas_src>

<mosaic_0001>
module attributes {stable_mosaic.version = 11 : i64} {
  func.func @_kernel_inplace(%arg0: i32, %arg1: i32, %arg2: memref<16x128xf32, #tpu.memory_space<vmem>>, %arg3: memref<128x128xf32, #tpu.memory_space<vmem>>, %arg4: memref<1x128xf32, #tpu.memory_space<vmem>>, %arg5: memref<1x128xf32, #tpu.memory_space<vmem>>, %arg6: memref<16x128xf32, #tpu.memory_space<vmem>>) attributes {dimension_semantics = [#tpu.dimension_semantics<parallel>, #tpu.dimension_semantics<arbitrary>], iteration_bounds = array<i64: 1, 1>, scalar_prefetch = 0 : i64, scratch_operands = 0 : i64, tpu.core_type = #tpu.core_type<tc>, window_params = [{transform_indices = @transform_0, window_bounds = array<i64: 16, 128>}, {transform_indices = @transform_1, window_bounds = array<i64: 128, 128>}, {transform_indices = @transform_2, window_bounds = array<i64: 1, 128>}, {transform_indices = @transform_3, window_bounds = array<i64: 1, 128>}, {transform_indices = @transform_4, window_bounds = array<i64: 16, 128>}]} {
    %c0_i32 = arith.constant 0 : i32
    %0 = arith.cmpi eq, %arg1, %c0_i32 : i32
    %1 = arith.extui %0 : i1 to i32
    %c0_i32_0 = arith.constant 0 : i32
    %2 = arith.cmpi ne, %1, %c0_i32_0 : i32
    scf.if %2 {
      %cst_10 = arith.constant 0.000000e+00 : f32
      %12 = vector.broadcast %cst_10 : f32 to vector<16x128xf32>
      %c0_11 = arith.constant 0 : index
      %c0_12 = arith.constant 0 : index
      %13 = vector.load %arg6[%c0_11, %c0_12] : memref<16x128xf32, #tpu.memory_space<vmem>>, vector<16x128xf32>
      tpu.vector_store %arg6[%c0_11, %c0_12], %12 {strides = array<i32>} : memref<16x128xf32, #tpu.memory_space<vmem>>, vector<16x128xf32>,
    } else {
    }
    %c0 = arith.constant 0 : index
    %c0_1 = arith.constant 0 : index
    %3 = vector.load %arg6[%c0, %c0_1] : memref<16x128xf32, #tpu.memory_space<vmem>>, vector<16x128xf32>
    %c0_2 = arith.constant 0 : index
    %c0_3 = arith.constant 0 : index
    %4 = vector.load %arg2[%c0_2, %c0_3] : memref<16x128xf32, #tpu.memory_space<vmem>>, vector<16x128xf32>
    %c0_4 = arith.constant 0 : index
    %c0_5 = arith.constant 0 : index
    %5 = vector.load %arg3[%c0_4, %c0_5] : memref<128x128xf32, #tpu.memory_space<vmem>>, vector<128x128xf32>
    %cst = arith.constant dense<0.000000e+00> : vector<16x128xf32>
    %6 = tpu.matmul %4, %5, %cst {dimension_numbers = #tpu.dot_dimension_numbers<[1], [0], [0], [1], [0, 0, 1, 1], [], []>} : vector<16x128xf32>, vector<128x128xf32>, vector<16x128xf32> -> vector<16x128xf32>
    %7 = arith.addf %3, %6 : vector<16x128xf32>
    %c0_6 = arith.constant 0 : index
    %c0_7 = arith.constant 0 : index
    %8 = vector.load %arg6[%c0_6, %c0_7] : memref<16x128xf32, #tpu.memory_space<vmem>>, vector<16x128xf32>
    tpu.vector_store %arg6[%c0_6, %c0_7], %7 {strides = array<i32>} : memref<16x128xf32, #tpu.memory_space<vmem>>, vector<16x128xf32>,
    %c0_i32_8 = arith.constant 0 : i32
    %9 = arith.cmpi eq, %arg1, %c0_i32_8 : i32
    %10 = arith.extui %9 : i1 to i32
    %c0_i32_9 = arith.constant 0 : i32
    %11 = arith.cmpi ne, %10, %c0_i32_9 : i32
    scf.if %11 {
      %c0_10 = arith.constant 0 : index
      %c0_11 = arith.constant 0 : index
      %12 = vector.load %arg6[%c0_10, %c0_11] : memref<16x128xf32, #tpu.memory_space<vmem>>, vector<16x128xf32>
      %cst_12 = arith.constant dense<0.000000e+00> : vector<128xf32>
      %13 = vector.multi_reduction <add>, %12, %cst_12 [0] : vector<16x128xf32> to vector<128xf32>
      %14 = vector.shape_cast %13 : vector<128xf32> to vector<1x128xf32>
      %cst_13 = arith.constant 1.600000e+01 : f32
      %15 = vector.broadcast %cst_13 : f32 to vector<1x128xf32>
      %16 = arith.divf %14, %15 : vector<1x128xf32>
      %17 = vector.broadcast %16 : vector<1x128xf32> to vector<16x128xf32>
      %18 = arith.subf %12, %17 : vector<16x128xf32>
      %19 = arith.mulf %18, %18 : vector<16x128xf32>
      %cst_14 = arith.constant dense<0.000000e+00> : vector<128xf32>
      %20 = vector.multi_reduction <add>, %19, %cst_14 [0] : vector<16x128xf32> to vector<128xf32>
      %21 = vector.shape_cast %20 : vector<128xf32> to vector<1x128xf32>
      %cst_15 = arith.constant 1.600000e+01 : f32
      %22 = vector.broadcast %cst_15 : f32 to vector<1x128xf32>
      %23 = arith.divf %21, %22 : vector<1x128xf32>
      %c0_16 = arith.constant 0 : index
      %c0_17 = arith.constant 0 : index
      %24 = vector.load %arg4[%c0_16, %c0_17] : memref<1x128xf32, #tpu.memory_space<vmem>>, vector<1x128xf32>
      %cst_18 = arith.constant 9.99999974E-6 : f32
      %25 = vector.broadcast %cst_18 : f32 to vector<1x128xf32>
      %26 = arith.addf %23, %25 : vector<1x128xf32>
      %27 = math.rsqrt %26 : vector<1x128xf32>
      %28 = arith.mulf %24, %27 : vector<1x128xf32>
      %c0_19 = arith.constant 0 : index
      %c0_20 = arith.constant 0 : index
      %29 = vector.load %arg5[%c0_19, %c0_20] : memref<1x128xf32, #tpu.memory_space<vmem>>, vector<1x128xf32>
      %30 = arith.mulf %16, %28 : vector<1x128xf32>
      %31 = arith.subf %29, %30 : vector<1x128xf32>
      %32 = vector.broadcast %28 : vector<1x128xf32> to vector<16x128xf32>
      %33 = arith.mulf %12, %32 : vector<16x128xf32>
      %34 = vector.broadcast %31 : vector<1x128xf32> to vector<16x128xf32>
      %35 = arith.addf %33, %34 : vector<16x128xf32>
      %cst_21 = arith.constant 0.000000e+00 : f32
      %36 = vector.broadcast %cst_21 : f32 to vector<16x128xf32>
      %37 = arith.maximumf %35, %36 : vector<16x128xf32>
      %c0_22 = arith.constant 0 : index
      %c0_23 = arith.constant 0 : index
      %38 = vector.load %arg6[%c0_22, %c0_23] : memref<16x128xf32, #tpu.memory_space<vmem>>, vector<16x128xf32>
      tpu.vector_store %arg6[%c0_22, %c0_23], %37 {strides = array<i32>} : memref<16x128xf32, #tpu.memory_space<vmem>>, vector<16x128xf32>,
    } else {
    }
    return
  }
  func.func @transform_0(%arg0: i32, %arg1: i32) -> (i32, i32) {
    %c0_i32 = arith.constant 0 : i32
    %c0_i32_0 = arith.constant 0 : i32
    return %c0_i32, %arg1 : i32, i32
  }
  func.func @transform_1(%arg0: i32, %arg1: i32) -> (i32, i32) {
    %c0_i32 = arith.constant 0 : i32
    return %arg1, %arg0 : i32, i32
  }
  func.func @transform_2(%arg0: i32, %arg1: i32) -> (i32, i32) {
    %c0_i32 = arith.constant 0 : i32
    %c0_i32_0 = arith.constant 0 : i32
    return %c0_i32, %arg0 : i32, i32
  }
  func.func @transform_3(%arg0: i32, %arg1: i32) -> (i32, i32) {
    %c0_i32 = arith.constant 0 : i32
    %c0_i32_0 = arith.constant 0 : i32
    return %c0_i32, %arg0 : i32, i32
  }
  func.func @transform_4(%arg0: i32, %arg1: i32) -> (i32, i32) {
    %c0_i32 = arith.constant 0 : i32
    %c0_i32_0 = arith.constant 0 : i32
    return %c0_i32, %arg0 : i32, i32
  }
}

</mosaic_0001>

<llo_original>
// kernel: dense_block_forward.1
$region0: #{dense_block_forward.1}
  #allocation0 [shape = 'u32[]', space=smem, size = 0x4, offset = 0x4, fixed_abs, tag = 'smem constant byte address 0x4 - core index']
  #allocation1 [shape = 'u32[144,128]{1,0:T(1,128)}', space=vmem, size = 0x12000, scoped, tag = 'internal scratch']
  %s0 = inlined_call_operand.vmem [shape: f32[16,128], index: 0, kind: input, shape index: {}]
  %s1 = inlined_call_operand.vmem [shape: f32[128,128], index: 1, kind: input, shape index: {}]
  %s2 = inlined_call_operand.vmem [shape: f32[1,128], index: 2, kind: input, shape index: {}]
  %s3 = inlined_call_operand.vmem [shape: f32[1,128], index: 3, kind: input, shape index: {}]
  %s4 = inlined_call_operand.vmem [shape: f32[16,128], index: 4, kind: output, shape index: {}]
  %s5 = sld [smem:[#allocation0]]
  $region34: #{dense_block_forward.1} parent=0
    _
  %s7 = ssub.s32 1, %s5
  %s8 = scalar_select 0, %s7, %s5
  // Predicated region
  $region2: #{dense_block_forward.1} parent=0 // pred_check
    _
  $region3: #{dense_block_forward.1} parent=0 // pred_check_branch
    %10 = sbr.rel (0) target = $region5
  $region4: #{dense_block_forward.1} parent=0 // pred_region
    _
  $region5: #{dense_block_forward.1} parent=0 // pred_fallthru
    _
  // Predicated region
  $region6: #{dense_block_forward.1} parent=0 // pred_check
    _
  $region7: #{dense_block_forward.1} parent=0 // pred_check_branch
    %12 = sbr.rel (0) target = $region9
  $region8: #{dense_block_forward.1} parent=0 // pred_region
    _
  $region9: #{dense_block_forward.1} parent=0 // pred_fallthru
    _
  // Predicated region
  $region10: #{dense_block_forward.1} parent=0 // pred_check
    _
  $region11: #{dense_block_forward.1} parent=0 // pred_check_branch
    %14 = sbr.rel (0) target = $region13
  $region12: #{dense_block_forward.1} parent=0 // pred_region
    _
  $region13: #{dense_block_forward.1} parent=0 // pred_fallthru
    _
  // Predicated region
  $region14: #{dense_block_forward.1} parent=0 // pred_check
    _
  $region15: #{dense_block_forward.1} parent=0 // pred_check_branch
    %16 = sbr.rel (0) target = $region17
  $region16: #{dense_block_forward.1} parent=0 // pred_region
    _
  $region17: #{dense_block_forward.1} parent=0 // pred_fallthru
    _
  %p17 = scmp.eq.s32.totalorder 0, 0
  // Predicated region
  $region18: #{dense_block_forward.1} parent=0 // pred_check
    %p18 = pneg %p17
  $region19: #{dense_block_forward.1} parent=0 // pred_check_branch
    %20 = sbr.rel (%p18) target = $region21
  $region20: #{dense_block_forward.1} parent=0 // pred_region
    %21 = vst [vmem:[%s4] sm:$0xff] 0.0
    %22 = vst [vmem:[%s4 + $0x8] sm:$0xff] 0.0
  $region21: #{dense_block_forward.1} parent=0 // pred_fallthru
    _
  %v23 = vld [vmem:[%s4] sm:$0xff]
  %v24 = vld [vmem:[%s4 + $0x8] sm:$0xff]
  %v25 = vld [vmem:[%s0] sm:$0xff]
  %v26 = vld [vmem:[%s0 + $0x8] sm:$0xff]
  %v27 = vld [vmem:[%s1] sm:$0xff]
  %v28 = vld [vmem:[%s1 + $0x8] sm:$0xff]
  %v29 = vld [vmem:[%s1 + $0x10] sm:$0xff]
  %v30 = vld [vmem:[%s1 + $0x18] sm:$0xff]
  %v31 = vld [vmem:[%s1 + $0x20] sm:$0xff]
  %v32 = vld [vmem:[%s1 + $0x28] sm:$0xff]
  %v33 = vld [vmem:[%s1 + $0x30] sm:$0xff]
  %v34 = vld [vmem:[%s1 + $0x38] sm:$0xff]
  %v35 = vld [vmem:[%s1 + $0x40] sm:$0xff]
  %v36 = vld [vmem:[%s1 + $0x48] sm:$0xff]
  %v37 = vld [vmem:[%s1 + $0x50] sm:$0xff]
  %v38 = vld [vmem:[%s1 + $0x58] sm:$0xff]
  %v39 = vld [vmem:[%s1 + $0x60] sm:$0xff]
  %v40 = vld [vmem:[%s1 + $0x68] sm:$0xff]
  %v41 = vld [vmem:[%s1 + $0x70] sm:$0xff]
  %v42 = vld [vmem:[%s1 + $0x78] sm:$0xff]
  %43 = vmatprep.subr.mxu0 0.0
  %44 = vmatpush1.msra.mxu0 %v27
  %45 = vmatprep.subr.mxu0 0.0
  %46 = vmatpush1.msra.mxu0 %v28
  %47 = vmatprep.subr.mxu0 0.0
  %48 = vmatpush1.msra.mxu0 %v29
  %49 = vmatprep.subr.mxu0 0.0
  %50 = vmatpush1.msra.mxu0 %v30
  %51 = vmatprep.subr.mxu0 0.0
  %52 = vmatpush1.msra.mxu0 %v31
  %53 = vmatprep.subr.mxu0 0.0
  %54 = vmatpush1.msra.mxu0 %v32
  %55 = vmatprep.subr.mxu0 0.0
  %56 = vmatpush1.msra.mxu0 %v33
  %57 = vmatprep.subr.mxu0 0.0
  %58 = vmatpush1.msra.mxu0 %v34
  %59 = vmatprep.subr.mxu0 0.0
  %60 = vmatpush1.msra.mxu0 %v35
  %61 = vmatprep.subr.mxu0 0.0
  %62 = vmatpush1.msra.mxu0 %v36
  %63 = vmatprep.subr.mxu0 0.0
  %64 = vmatpush1.msra.mxu0 %v37
  %65 = vmatprep.subr.mxu0 0.0
  %66 = vmatpush1.msra.mxu0 %v38
  %67 = vmatprep.subr.mxu0 0.0
  %68 = vmatpush1.msra.mxu0 %v39
  %69 = vmatprep.subr.mxu0 0.0
  %70 = vmatpush1.msra.mxu0 %v40
  %71 = vmatprep.subr.mxu0 0.0
  %72 = vmatpush1.msra.mxu0 %v41
  %73 = vmatprep.subr.mxu0 0.0
  %74 = vmatpush1.msra.mxu0 %v42
  %75 = vmatprep.subr.mxu0 0.0
  %76 = vmatpush1.msra.mxu0 0.0
  %77 = vmatprep.subr.mxu0 0.0
  %78 = vmatpush1.msra.mxu0 0.0
  %79 = vmatprep.subr.mxu0 0.0
  %80 = vmatpush1.msra.mxu0 0.0
  %81 = vmatprep.subr.mxu0 0.0
  %82 = vmatpush1.msra.mxu0 0.0
  %83 = vmatprep.subr.mxu0 0.0
  %84 = vmatpush1.msra.mxu0 0.0
  %85 = vmatprep.subr.mxu0 0.0
  %86 = vmatpush1.msra.mxu0 0.0
  %87 = vmatprep.subr.mxu0 0.0
  %88 = vmatpush1.msra.mxu0 0.0
  %89 = vmatprep.subr.mxu0 0.0
  %90 = vmatpush1.msra.mxu0 0.0
  %91 = vmatprep.subr.mxu0 0.0
  %92 = vmatpush1.msra.mxu0 0.0
  %93 = vmatprep.subr.mxu0 0.0
  %94 = vmatpush1.msra.mxu0 0.0
  %95 = vmatprep.subr.mxu0 0.0
  %96 = vmatpush1.msra.mxu0 0.0
  %97 = vmatprep.subr.mxu0 0.0
  %98 = vmatpush1.msra.mxu0 0.0
  %99 = vmatprep.subr.mxu0 0.0
  %100 = vmatpush1.msra.mxu0 0.0
  %101 = vmatprep.subr.mxu0 0.0
  %102 = vmatpush1.msra.mxu0 0.0
  %103 = vmatprep.subr.mxu0 0.0
  %104 = vmatpush1.msra.mxu0 0.0
  %105 = vmatprep.subr.mxu0 0.0
  %106 = vmatpush1.msra.mxu0 0.0
  %107 = vmatprep.mubr.f32.mxu0 0.0
  %108 = vmatmul.mubr.f32.gmra.mrb[0].mxu0 %v25
  %v109 = vpop.f32.mrb[0].mxu0
  %v110 = vadd.f32 0.0, %v109
  %v111 = vpop.f32.mrb[0].mxu0
  %112 = vmatprep.mubr.f32.mxu0 0.0
  %113 = vmatmul.mubr.f32.gmra.mrb[0].mxu0 %v26
  %v114 = vpop.f32.mrb[0].mxu0
  %v115 = vadd.f32 0.0, %v114
  %v116 = vpop.f32.mrb[0].mxu0
  %117 = vdwg.mxu0
  %v118 = vadd.f32 %v23, %v110
  %v119 = vadd.f32 %v24, %v115
  %120 = vst [vmem:[%s4] sm:$0xff] %v118
  %121 = vst [vmem:[%s4 + $0x8] sm:$0xff] %v119
  // Predicated region
  $region22: #{dense_block_forward.1} parent=0 // pred_check
    %p122 = pneg %p17
  $region23: #{dense_block_forward.1} parent=0 // pred_check_branch
    %124 = sbr.rel (%p122) target = $region25
  $region24: #{dense_block_forward.1} parent=0 // pred_region
    %v125 = vld [vmem:[%s4] sm:$0xff]
    %v126 = vld [vmem:[%s4 + $0x8] sm:$0xff]
    %v127 = vadd.f32 %v125, %v126
    %v128 = vrot.slane %v127, 4
    %v129 = vadd.f32 %v127, %v128
    %v130 = vrot.slane %v129, 2
    %v131 = vadd.f32 %v129, %v130
    %v132 = vrot.slane %v131, 1
    %v133 = vadd.f32 %v131, %v132
    %v134 = vrcp.pop 16.0
    %v135 = vmul.f32 %v133, %v134
    %v136 = vsub.f32 %v125, %v135
    %v137 = vsub.f32 %v126, %v135
    %v138 = vmul.f32 %v136, %v136
    %v139 = vmul.f32 %v137, %v137
    %v140 = vadd.f32 %v138, %v139
    %v141 = vrot.slane %v140, 4
    %v142 = vadd.f32 %v140, %v141
    %v143 = vrot.slane %v142, 2
    %v144 = vadd.f32 %v142, %v143
    %v145 = vrot.slane %v144, 1
    %v146 = vadd.f32 %v144, %v145
    %v147 = vmul.f32 %v146, %v134
    %v148 = vld [vmem:[%s2] sm:$0x1]
    %v149 = vadd.f32 %v147, 1e-05
    %v150 = vrsqrt.pop %v149
    %v151 = vmul.f32 %v148, %v150
    %v152 = vld [vmem:[%s3] sm:$0x1]
    %v153 = vmul.f32 %v135, %v151
    %v154 = vsub.f32 %v152, %v153
    %v156 = vlaneseq
    %v157 = vshrl.u32 %v156, 7
    %v158 = vsub.s32 0, %v157
    %v159 = vrot.slane %v151, %v158
    %v161 = vmul.f32 %v125, %v159
    %v162 = vmul.f32 %v126, %v159
    %v164 = vlaneseq
    %v165 = vshrl.u32 %v164, 7
    %v166 = vsub.s32 0, %v165
    %v167 = vrot.slane %v154, %v166
    %v169 = vadd.f32 %v161, %v167
    %v170 = vadd.f32 %v162, %v167
    %v171 = vmax.f32 %v169, 0.0
    %v172 = vmax.f32 %v170, 0.0
    %173 = vst [vmem:[%s4] sm:$0xff] %v171
    %174 = vst [vmem:[%s4 + $0x8] sm:$0xff] %v172
  $region25: #{dense_block_forward.1} parent=0 // pred_fallthru
    _
  // Predicated region
  $region26: #{dense_block_forward.1} parent=0 // pred_check
    _
  $region27: #{dense_block_forward.1} parent=0 // pred_check_branch
    %176 = sbr.rel (0) target = $region29
  $region28: #{dense_block_forward.1} parent=0 // pred_region
    _
  $region29: #{dense_block_forward.1} parent=0 // pred_fallthru
    _
  // Predicated region
  $region30: #{dense_block_forward.1} parent=0 // pred_check
    _
  $region31: #{dense_block_forward.1} parent=0 // pred_check_branch
    %178 = sbr.rel (0) target = $region33
  $region32: #{dense_block_forward.1} parent=0 // pred_region
    _
  $region33: #{dense_block_forward.1} parent=0 // pred_fallthru
    _

</llo_original>
